<compile_context>
chip_gen: v6e
topology: v6e:2x2x1
jax: 0.10.0
libtpu: 0.0.40
codegen_flags: <defaults>
</compile_context>

<pallas_src>
import functools

import jax
import jax.numpy as jnp
from jax.experimental import pallas as pl
from jax.experimental.pallas import tpu as pltpu


def _round_up(x, m):
    return ((x + m - 1) // m) * m


def _choose_block_k(d_pad, hidden, target_tile_bytes=4 << 20):
    """Largest block_k that divides d_pad, is a multiple of 128, and keeps one
    bf16 W tile under ~target_tile_bytes (double-buffered it stays tiny on all
    generations, incl. v7x's 64 MiB VMEM)."""
    max_bk = max(128, ((target_tile_bytes // (hidden * 2)) // 128) * 128)
    if d_pad <= max_bk:
        return d_pad
    n_units = d_pad // 128
    for div in range(1, n_units + 1):
        if n_units % div == 0 and (n_units // div) * 128 <= max_bk:
            return (n_units // div) * 128
    return 128


def _safety_kernel(x_ref, w_ref, tab_ref, scores_ref, acc_ref, *, block_k):
    """K-tiled projection + L2-normalize + fused similarity epilogue.

    grid = (K_tiles,) over the flattened-pixel reduction axis ("arbitrary").
      x_ref      : (B, D_pad)    f32, fully VMEM-resident clip inputs
      w_ref      : (block_k, H)  bf16 block of the projection matrix (streamed)
      tab_ref    : (H, N_PAD)    bf16 pre-normalized [special|concept] table (resident)
      scores_ref : (B, N_PAD)    f32 output, written only in the epilogue
      acc_ref    : (B, H)        f32 accumulator scratch (persists across k)
    """
    k = pl.program_id(0)

    @pl.when(k == 0)
    def _init():
        acc_ref[...] = jnp.zeros_like(acc_ref)

    # Slice this K-tile's columns out of the resident x and cast to bf16
    # in-kernel (VPU); bf16 x bf16 -> f32 accumulate on the MXU.
    start = pl.multiple_of(k * block_k, 128)
    x_tile = x_ref[:, pl.ds(start, block_k)].astype(jnp.bfloat16)
    acc_ref[...] += jnp.dot(x_tile, w_ref[...],
                            preferred_element_type=jnp.float32)

    @pl.when(k == pl.num_programs(0) - 1)
    def _epilogue():
        emb = acc_ref[...]
        inv_norm = jax.lax.rsqrt(
            jnp.sum(emb * emb, axis=-1, keepdims=True) + 1e-12)
        emb_bf16 = (emb * inv_norm).astype(jnp.bfloat16)
        # Single lane-dense bf16 similarity matmul against the fused table.
        scores_ref[...] = jnp.dot(emb_bf16, tab_ref[...],
                                  preferred_element_type=jnp.float32)


def _safety_pallas_call(x_flat_f32, w_proj_bf16, tables_bf16, block_k):
    B, D_pad = x_flat_f32.shape
    _, H = w_proj_bf16.shape
    _, N_pad = tables_bf16.shape
    k_tiles = D_pad // block_k

    grid_spec = pltpu.PrefetchScalarGridSpec(
        num_scalar_prefetch=0,
        grid=(k_tiles,),
        in_specs=[
            pl.BlockSpec((B, D_pad), lambda k: (0, 0)),     # x: resident, f32
            pl.BlockSpec((block_k, H), lambda k: (k, 0)),   # W_proj: bf16 stream
            pl.BlockSpec((H, N_pad), lambda k: (0, 0)),     # fused table: resident
        ],
        out_specs=pl.BlockSpec((B, N_pad), lambda k: (0, 0)),  # resident output
        scratch_shapes=[pltpu.VMEM((B, H), jnp.float32)],       # f32 accumulator
    )

    # Working set: resident f32 x + double-buffered bf16 W stream + resident
    # bf16 table + f32 output + f32 accumulator.  Cap at 40 MiB so the limit
    # is safe on v7x (64 MiB physical VMEM) as well as v5e/v6e (128 MiB).
    vmem_bytes = (B * D_pad * 4 + 2 * (block_k * H * 2)
                  + 2 * (H * N_pad * 2) + 2 * (B * N_pad * 4) + B * H * 4)
    vmem_limit = int(min(max(2 * vmem_bytes, 16 << 20), 40 << 20))

    cost = pl.CostEstimate(
        flops=2 * B * D_pad * H + 2 * B * H * N_pad,
        transcendentals=B,
        bytes_accessed=(B * D_pad * 4 + D_pad * H * 2
                        + H * N_pad * 2 + B * N_pad * 4),
    )

    # Single TensorCore on purpose: splitting the tiny batch across cores would
    # make each core re-stream the full W_proj (2x HBM bytes on the hot stream).
    return pl.pallas_call(
        functools.partial(_safety_kernel, block_k=block_k),
        out_shape=jax.ShapeDtypeStruct((B, N_pad), jnp.float32),
        grid_spec=grid_spec,
        compiler_params=pltpu.CompilerParams(
            dimension_semantics=("arbitrary",),
            vmem_limit_bytes=vmem_limit),
        cost_estimate=cost,
    )(x_flat_f32, w_proj_bf16, tables_bf16)


def prepare_safety_params(params, *, block_k=None):
    """One-time (per-weights) preprocessing hoisted out of the kernel:
    pad W_proj's reduction dim only to the 128-lane quantum (hidden width kept
    as-is -> no 4x HBM inflation), cast bf16; L2-normalize, transpose,
    concatenate and zero-pad the special/concept tables into one lane-dense
    bf16 [H, 128] matrix."""
    w = params["w_proj"].astype(jnp.float32)
    d_in, hidden = w.shape

    d_pad = _round_up(d_in, 128)
    if block_k is None:
        block_k = _choose_block_k(d_pad, hidden)
    else:
        block_k = min(block_k, d_pad)
        assert block_k % 128 == 0, "block_k must be a multiple of 128"
        d_pad = _round_up(d_in, block_k)

    w_pad = jnp.zeros((d_pad, hidden), jnp.float32).at[:d_in, :].set(w)
    w_pad = w_pad.astype(jnp.bfloat16)

    def _l2norm(t):
        return t * jax.lax.rsqrt(jnp.sum(t * t, axis=-1, keepdims=True) + 1e-12)

    s = _l2norm(params["special_care_embeds"].astype(jnp.float32))
    c = _l2norm(params["concept_embeds"].astype(jnp.float32))
    ns, nc = s.shape[0], c.shape[0]
    n_pad = _round_up(ns + nc, 128)

    tab = jnp.zeros((hidden, n_pad), jnp.float32)
    tab = tab.at[:, :ns].set(s.T)
    tab = tab.at[:, ns:ns + nc].set(c.T)
    tab = tab.astype(jnp.bfloat16)

    return {
        "w_proj_padded": w_pad,
        "tables": tab,
        "d_in": d_in,
        "d_pad": d_pad,
        "block_k": int(block_k),
        "n_special": ns,
        "n_concepts": nc,
    }


def neuron_safety_model_wrap_forward(clip_inputs, prepared):
    """Equivalent of NeuronSafetyModelWrap.forward: list(safety_model(x).values())."""
    B = clip_inputs.shape[0]
    d_in, d_pad = prepared["d_in"], prepared["d_pad"]

    # Glue: flatten NCHW pixels to [B, C*H*W]; keep f32 (the bf16 cast happens
    # per K-tile in-kernel, so no extra HBM round trip for a bf16 copy).
    x_flat = clip_inputs.reshape(B, -1).astype(jnp.float32)
    if d_pad != d_in:
        x_flat = jnp.pad(x_flat, ((0, 0), (0, d_pad - d_in)))

    scores = _safety_pallas_call(x_flat, prepared["w_proj_padded"],
                                 prepared["tables"], prepared["block_k"])

    ns, nc = prepared["n_special"], prepared["n_concepts"]
    special_scores = scores[:, :ns]
    concept_scores = scores[:, ns:ns + nc]
    # Dict insertion order: {"special_scores": ..., "concept_scores": ...}
    return [special_scores, concept_scores]


if __name__ == "__main__":
    B, C, H, W = 2, 4, 16, 16
    hidden, n_concepts, n_special = 32, 16, 8

    key = jax.random.PRNGKey(0)
    k_x, k1, k2, k3 = jax.random.split(key, 4)
    clip_inputs = jax.random.normal(k_x, (B, C, H, W), jnp.float32)
    params = {
        "w_proj": jax.random.normal(k1, (C * H * W, hidden), jnp.float32) * 0.02,
        "concept_embeds": jax.random.normal(k2, (n_concepts, hidden), jnp.float32),
        "special_care_embeds": jax.random.normal(k3, (n_special, hidden), jnp.float32),
    }

    # Pure-JAX reference matching the kernel's bf16-quantized operands
    # (f32 accumulation) for x, W_proj, the normalized image embedding and the
    # normalized concept/special tables; everything else in f32.
    x_flat = clip_inputs.reshape(B, -1)
    xq = x_flat.astype(jnp.bfloat16).astype(jnp.float32)
    wq = params["w_proj"].astype(jnp.bfloat16).astype(jnp.float32)
    emb = jnp.dot(xq, wq, precision=jax.lax.Precision.HIGHEST)
    emb = emb * jax.lax.rsqrt(jnp.sum(emb * emb, axis=-1, keepdims=True) + 1e-12)
    embq = emb.astype(jnp.bfloat16).astype(jnp.float32)

    def _l2(t):
        return t * jax.lax.rsqrt(jnp.sum(t * t, axis=-1, keepdims=True) + 1e-12)

    sq = _l2(params["special_care_embeds"]).astype(jnp.bfloat16).astype(jnp.float32)
    cq = _l2(params["concept_embeds"]).astype(jnp.bfloat16).astype(jnp.float32)
    ref = [jnp.dot(embq, sq.T, precision=jax.lax.Precision.HIGHEST),
           jnp.dot(embq, cq.T, precision=jax.lax.Precision.HIGHEST)]

    def run_and_check(prepared):
        outs = neuron_safety_model_wrap_forward(clip_inputs, prepared)
        outs = [jax.block_until_ready(o) for o in outs]
        for got, want in zip(outs, ref):
            assert got.shape == want.shape, (got.shape, want.shape)
            err = float(jnp.max(jnp.abs(got - want)))
            assert jnp.allclose(got, want, atol=5e-3, rtol=5e-3), err

    # 1) Auto block_k: whole W fits VMEM -> single grid step (no K streaming).
    run_and_check(prepare_safety_params(params))
    # 2) Forced block_k=256 -> grid=(4,), exercising the K-tiled accumulator
    #    and the in-kernel pl.ds slicing of the resident x.
    run_and_check(prepare_safety_params(params, block_k=256))

    print("KERNEL_OK")
</pallas_src>

<mosaic_0001>
module attributes {stable_mosaic.version = 11 : i64} {
  func.func @_safety_kernel(%arg0: i32, %arg1: memref<2x1024xf32, #tpu.memory_space<vmem>>, %arg2: memref<1024x32xbf16, #tpu.memory_space<vmem>>, %arg3: memref<32x128xbf16, #tpu.memory_space<vmem>>, %arg4: memref<2x128xf32, #tpu.memory_space<vmem>>, %arg5: memref<2x32xf32, #tpu.memory_space<vmem>>) attributes {dimension_semantics = [#tpu.dimension_semantics<arbitrary>], iteration_bounds = array<i64: 1>, scalar_prefetch = 0 : i64, scratch_operands = 1 : i64, tpu.core_type = #tpu.core_type<tc>, window_params = [{pipeline_mode = #tpu.pipeline_mode<synchronous>, transform_indices = @transform_0, window_bounds = array<i64: 2, 1024>}, {transform_indices = @transform_1, window_bounds = array<i64: 1024, 32>}, {pipeline_mode = #tpu.pipeline_mode<synchronous>, transform_indices = @transform_2, window_bounds = array<i64: 32, 128>}, {pipeline_mode = #tpu.pipeline_mode<synchronous>, transform_indices = @transform_3, window_bounds = array<i64: 2, 128>}]} {
    %c0_i32 = arith.constant 0 : i32
    %0 = arith.cmpi eq, %arg0, %c0_i32 : i32
    %1 = arith.extui %0 : i1 to i32
    %c0_i32_0 = arith.constant 0 : i32
    %2 = arith.cmpi ne, %1, %c0_i32_0 : i32
    scf.if %2 {
      %cst_9 = arith.constant 0.000000e+00 : f32
      %16 = vector.broadcast %cst_9 : f32 to vector<2x32xf32>
      %c0_10 = arith.constant 0 : index
      %c0_11 = arith.constant 0 : index
      %17 = vector.load %arg5[%c0_10, %c0_11] : memref<2x32xf32, #tpu.memory_space<vmem>>, vector<2x32xf32>
      tpu.vector_store %arg5[%c0_10, %c0_11], %16 {strides = array<i32>} : memref<2x32xf32, #tpu.memory_space<vmem>>, vector<2x32xf32>,
    } else {
    }
    %c1024_i32 = arith.constant 1024 : i32
    %3 = arith.muli %arg0, %c1024_i32 : i32
    %4 = tpu.assume_multiple %3, 128 : i32
    %c0 = arith.constant 0 : index
    %5 = arith.index_cast %4 : i32 to index
    %6 = vector.load %arg1[%c0, %5] : memref<2x1024xf32, #tpu.memory_space<vmem>>, vector<2x1024xf32>
    %7 = arith.truncf %6 : vector<2x1024xf32> to vector<2x1024xbf16>
    %c0_1 = arith.constant 0 : index
    %c0_2 = arith.constant 0 : index
    %8 = vector.load %arg5[%c0_1, %c0_2] : memref<2x32xf32, #tpu.memory_space<vmem>>, vector<2x32xf32>
    %c0_3 = arith.constant 0 : index
    %c0_4 = arith.constant 0 : index
    %9 = vector.load %arg2[%c0_3, %c0_4] : memref<1024x32xbf16, #tpu.memory_space<vmem>>, vector<1024x32xbf16>
    %cst = arith.constant dense<0.000000e+00> : vector<2x32xf32>
    %10 = tpu.matmul %7, %9, %cst {dimension_numbers = #tpu.dot_dimension_numbers<[1], [0], [0], [1], [0, 0, 1, 1], [], []>} : vector<2x1024xbf16>, vector<1024x32xbf16>, vector<2x32xf32> -> vector<2x32xf32>
    %11 = arith.addf %8, %10 : vector<2x32xf32>
    %c0_5 = arith.constant 0 : index
    %c0_6 = arith.constant 0 : index
    %12 = vector.load %arg5[%c0_5, %c0_6] : memref<2x32xf32, #tpu.memory_space<vmem>>, vector<2x32xf32>
    tpu.vector_store %arg5[%c0_5, %c0_6], %11 {strides = array<i32>} : memref<2x32xf32, #tpu.memory_space<vmem>>, vector<2x32xf32>,
    %c0_i32_7 = arith.constant 0 : i32
    %13 = arith.cmpi eq, %arg0, %c0_i32_7 : i32
    %14 = arith.extui %13 : i1 to i32
    %c0_i32_8 = arith.constant 0 : i32
    %15 = arith.cmpi ne, %14, %c0_i32_8 : i32
    scf.if %15 {
      %c0_9 = arith.constant 0 : index
      %c0_10 = arith.constant 0 : index
      %16 = vector.load %arg5[%c0_9, %c0_10] : memref<2x32xf32, #tpu.memory_space<vmem>>, vector<2x32xf32>
      %17 = arith.mulf %16, %16 : vector<2x32xf32>
      %cst_11 = arith.constant dense<0.000000e+00> : vector<2xf32>
      %18 = vector.multi_reduction <add>, %17, %cst_11 [1] : vector<2x32xf32> to vector<2xf32>
      %19 = vector.shape_cast %18 : vector<2xf32> to vector<2x1xf32>
      %cst_12 = arith.constant 9.99999996E-13 : f32
      %20 = vector.broadcast %cst_12 : f32 to vector<2x1xf32>
      %21 = arith.addf %19, %20 : vector<2x1xf32>
      %22 = math.rsqrt %21 : vector<2x1xf32>
      %23 = vector.broadcast %22 : vector<2x1xf32> to vector<2x32xf32>
      %24 = arith.mulf %16, %23 : vector<2x32xf32>
      %25 = arith.truncf %24 : vector<2x32xf32> to vector<2x32xbf16>
      %c0_13 = arith.constant 0 : index
      %c0_14 = arith.constant 0 : index
      %26 = vector.load %arg3[%c0_13, %c0_14] : memref<32x128xbf16, #tpu.memory_space<vmem>>, vector<32x128xbf16>
      %cst_15 = arith.constant dense<0.000000e+00> : vector<2x128xf32>
      %27 = tpu.matmul %25, %26, %cst_15 {dimension_numbers = #tpu.dot_dimension_numbers<[1], [0], [0], [1], [0, 0, 1, 1], [], []>} : vector<2x32xbf16>, vector<32x128xbf16>, vector<2x128xf32> -> vector<2x128xf32>
      %c0_16 = arith.constant 0 : index
      %c0_17 = arith.constant 0 : index
      %28 = vector.load %arg4[%c0_16, %c0_17] : memref<2x128xf32, #tpu.memory_space<vmem>>, vector<2x128xf32>
      tpu.vector_store %arg4[%c0_16, %c0_17], %27 {strides = array<i32>} : memref<2x128xf32, #tpu.memory_space<vmem>>, vector<2x128xf32>,
    } else {
    }
    return
  }
  func.func @transform_0(%arg0: i32) -> (i32, i32) {
    %c0_i32 = arith.constant 0 : i32
    %c0_i32_0 = arith.constant 0 : i32
    %c0_i32_1 = arith.constant 0 : i32
    return %c0_i32, %c0_i32_0 : i32, i32
  }
  func.func @transform_1(%arg0: i32) -> (i32, i32) {
    %c0_i32 = arith.constant 0 : i32
    %c0_i32_0 = arith.constant 0 : i32
    return %arg0, %c0_i32 : i32, i32
  }
  func.func @transform_2(%arg0: i32) -> (i32, i32) {
    %c0_i32 = arith.constant 0 : i32
    %c0_i32_0 = arith.constant 0 : i32
    %c0_i32_1 = arith.constant 0 : i32
    return %c0_i32, %c0_i32_0 : i32, i32
  }
  func.func @transform_3(%arg0: i32) -> (i32, i32) {
    %c0_i32 = arith.constant 0 : i32
    %c0_i32_0 = arith.constant 0 : i32
    %c0_i32_1 = arith.constant 0 : i32
    return %c0_i32, %c0_i32_0 : i32, i32
  }
}

</mosaic_0001>

<llo_original>
// kernel: tpu_custom_call.1
$region0: #{tpu_custom_call.1}
  #allocation0 [shape = 'u32[]', space=smem, size = 0x4, offset = 0x4, fixed_abs, tag = 'smem constant byte address 0x4 - core index']
  #allocation1 [shape = 'u32[144,128]{1,0:T(1,128)}', space=vmem, size = 0x12000, scoped, tag = 'internal scratch']
  #allocation2 [shape = 'f32[2,32]{1,0:T(2,128)}', space=vmem, size = 0x400, scoped, tag = 'scratch operand']
  %s0 = inlined_call_operand.vmem [shape: f32[2,1024], index: 0, kind: input, shape index: {}]
  %s1 = inlined_call_operand.vmem [shape: bf16[1024,32], index: 1, kind: input, shape index: {}]
  %s2 = inlined_call_operand.vmem [shape: bf16[32,128], index: 2, kind: input, shape index: {}]
  %s3 = inlined_call_operand.hbm [shape: f32[2,128], index: 3, kind: output, shape index: {}]
  %s4 = sld [smem:[#allocation0]]
  $region30: #{tpu_custom_call.1} parent=0
    _
  %s6 = ssub.s32 1, %s4
  %s7 = scalar_select 0, %s6, %s4
  $region1: #{tpu_custom_call.1} parent=0
    #allocation3 [shape = 'u8[1024]{0}', space=vmem, size = 0x400, scoped, tag = 'output window, operand 0, single buffered']
    #allocation4 [shape = 's32[1]{0}', space=sflag, size = 0x4, scoped, tag = 'scoped memory for tpu_custom_call.1']
    %8 = vsyncpa [#allocation4], 0
    // Predicated region
    $region2: #{tpu_custom_call.1} parent=1 // pred_check
      _
    $region3: #{tpu_custom_call.1} parent=1 // pred_check_branch
      %10 = sbr.rel (0) target = $region5
    $region4: #{tpu_custom_call.1} parent=1 // pred_region
      _
    $region5: #{tpu_custom_call.1} parent=1 // pred_fallthru
      _
    // Predicated region
    $region6: #{tpu_custom_call.1} parent=1 // pred_check
      _
    $region7: #{tpu_custom_call.1} parent=1 // pred_check_branch
      %12 = sbr.rel (0) target = $region9
    $region8: #{tpu_custom_call.1} parent=1 // pred_region
      _
    $region9: #{tpu_custom_call.1} parent=1 // pred_fallthru
      _
    // Predicated region
    $region10: #{tpu_custom_call.1} parent=1 // pred_check
      _
    $region11: #{tpu_custom_call.1} parent=1 // pred_check_branch
      %14 = sbr.rel (0) target = $region13
    $region12: #{tpu_custom_call.1} parent=1 // pred_region
      _
    $region13: #{tpu_custom_call.1} parent=1 // pred_fallthru
      _
    %p16 = scmp.eq.s32.totalorder 0, 0
    // Predicated region
    $region14: #{tpu_custom_call.1} parent=1 // pred_check
      %p17 = pneg %p16
    $region15: #{tpu_custom_call.1} parent=1 // pred_check_branch
      %19 = sbr.rel (%p17) target = $region17
    $region16: #{tpu_custom_call.1} parent=1 // pred_region
      %vm20 = vcmask 254976
      %21 = vst.msk [vmem:[#allocation2] sm:$0x3] %vm20, 0.0
    $region17: #{tpu_custom_call.1} parent=1 // pred_fallthru
      _
    %s22 = smul.u32 0, 1024
    %s23 = sshra.s32 %s22, 7
    %s24 = sand.u32 %s22, 127
    %s25 = smul.addr %s23, 2
    %s26 = scalar_lea.vmem %s0, %s25
    %v27 = vld [vmem:[%s26] sm:$0xff]
    %v28 = vld [vmem:[%s26 + $0x8] sm:$0xff]
    %v31 = vcombine.high %v27, %v27
    %v33 = vunpack.c.l.s4 1983009808
    %v34 = vunpack.c.0.s8 %v33
    %v35 = vlaneseq
    %v36 = vshrl.u32 %v35, 7
    %v37 = vsub.s32 %v34, %v36
    %v38 = vrot.slane %v27, %v37
    %v40 = vunpack.c.l.s4 1983009808
    %v41 = vunpack.c.0.s8 %v40
    %v42 = vlaneseq
    %v43 = vshrl.u32 %v42, 7
    %v44 = vsub.s32 %v41, %v43
    %v45 = vrot.slane %v31, %v44
    %v46 = vcombine.high %v38, %v38
    %v47 = vcombine.high %v45, %v45
    %v48 = vcombine.high %v28, %v28
    %v50 = vunpack.c.l.s4 1983009808
    %v51 = vunpack.c.0.s8 %v50
    %v52 = vlaneseq
    %v53 = vshrl.u32 %v52, 7
    %v54 = vsub.s32 %v51, %v53
    %v55 = vrot.slane %v28, %v54
    %v57 = vunpack.c.l.s4 1983009808
    %v58 = vunpack.c.0.s8 %v57
    %v59 = vlaneseq
    %v60 = vshrl.u32 %v59, 7
    %v61 = vsub.s32 %v58, %v60
    %v62 = vrot.slane %v48, %v61
    %v63 = vcombine.high %v55, %v55
    %v64 = vcombine.high %v62, %v62
    %v73 = vpack.c.bf16 %v38, %v38
    %v74 = vpack.c.bf16 %v46, %v46
    %v75 = vpack.c.bf16 %v45, %v45
    %v76 = vpack.c.bf16 %v47, %v47
    %v77 = vpack.c.bf16 %v55, %v55
    %v78 = vpack.c.bf16 %v63, %v63
    %v79 = vpack.c.bf16 %v62, %v62
    %v80 = vpack.c.bf16 %v64, %v64
    %v81 = vld [vmem:[#allocation2] sm:$0x3]
    %v82 = vld [vmem:[%s1] sm:$0xf]
    %v83 = vld [vmem:[%s1 + $0x4] sm:$0xf]
    %v84 = vld [vmem:[%s1 + $0x8] sm:$0xf]
    %v85 = vld [vmem:[%s1 + $0xc] sm:$0xf]
    %v86 = vld [vmem:[%s1 + $0x10] sm:$0xf]
    %v87 = vld [vmem:[%s1 + $0x14] sm:$0xf]
    %v88 = vld [vmem:[%s1 + $0x18] sm:$0xf]
    %v89 = vld [vmem:[%s1 + $0x1c] sm:$0xf]
    %v90 = vld [vmem:[%s1 + $0x20] sm:$0xf]
    %v91 = vld [vmem:[%s1 + $0x24] sm:$0xf]
    %v92 = vld [vmem:[%s1 + $0x28] sm:$0xf]
    %v93 = vld [vmem:[%s1 + $0x2c] sm:$0xf]
    %v94 = vld [vmem:[%s1 + $0x30] sm:$0xf]
    %v95 = vld [vmem:[%s1 + $0x34] sm:$0xf]
    %v96 = vld [vmem:[%s1 + $0x38] sm:$0xf]
    %v97 = vld [vmem:[%s1 + $0x3c] sm:$0xf]
    %v98 = vld [vmem:[%s1 + $0x40] sm:$0xf]
    %v99 = vld [vmem:[%s1 + $0x44] sm:$0xf]
    %v100 = vld [vmem:[%s1 + $0x48] sm:$0xf]
    %v101 = vld [vmem:[%s1 + $0x4c] sm:$0xf]
    %v102 = vld [vmem:[%s1 + $0x50] sm:$0xf]
    %v103 = vld [vmem:[%s1 + $0x54] sm:$0xf]
    %v104 = vld [vmem:[%s1 + $0x58] sm:$0xf]
    %v105 = vld [vmem:[%s1 + $0x5c] sm:$0xf]
    %v106 = vld [vmem:[%s1 + $0x60] sm:$0xf]
    %v107 = vld [vmem:[%s1 + $0x64] sm:$0xf]
    %v108 = vld [vmem:[%s1 + $0x68] sm:$0xf]
    %v109 = vld [vmem:[%s1 + $0x6c] sm:$0xf]
    %v110 = vld [vmem:[%s1 + $0x70] sm:$0xf]
    %v111 = vld [vmem:[%s1 + $0x74] sm:$0xf]
    %v112 = vld [vmem:[%s1 + $0x78] sm:$0xf]
    %v113 = vld [vmem:[%s1 + $0x7c] sm:$0xf]
    %v114 = vld [vmem:[%s1 + $0x80] sm:$0xf]
    %v115 = vld [vmem:[%s1 + $0x84] sm:$0xf]
    %v116 = vld [vmem:[%s1 + $0x88] sm:$0xf]
    %v117 = vld [vmem:[%s1 + $0x8c] sm:$0xf]
    %v118 = vld [vmem:[%s1 + $0x90] sm:$0xf]
    %v119 = vld [vmem:[%s1 + $0x94] sm:$0xf]
    %v120 = vld [vmem:[%s1 + $0x98] sm:$0xf]
    %v121 = vld [vmem:[%s1 + $0x9c] sm:$0xf]
    %v122 = vld [vmem:[%s1 + $0xa0] sm:$0xf]
    %v123 = vld [vmem:[%s1 + $0xa4] sm:$0xf]
    %v124 = vld [vmem:[%s1 + $0xa8] sm:$0xf]
    %v125 = vld [vmem:[%s1 + $0xac] sm:$0xf]
    %v126 = vld [vmem:[%s1 + $0xb0] sm:$0xf]
    %v127 = vld [vmem:[%s1 + $0xb4] sm:$0xf]
    %v128 = vld [vmem:[%s1 + $0xb8] sm:$0xf]
    %v129 = vld [vmem:[%s1 + $0xbc] sm:$0xf]
    %v130 = vld [vmem:[%s1 + $0xc0] sm:$0xf]
    %v131 = vld [vmem:[%s1 + $0xc4] sm:$0xf]
    %v132 = vld [vmem:[%s1 + $0xc8] sm:$0xf]
    %v133 = vld [vmem:[%s1 + $0xcc] sm:$0xf]
    %v134 = vld [vmem:[%s1 + $0xd0] sm:$0xf]
    %v135 = vld [vmem:[%s1 + $0xd4] sm:$0xf]
    %v136 = vld [vmem:[%s1 + $0xd8] sm:$0xf]
    %v137 = vld [vmem:[%s1 + $0xdc] sm:$0xf]
    %v138 = vld [vmem:[%s1 + $0xe0] sm:$0xf]
    %v139 = vld [vmem:[%s1 + $0xe4] sm:$0xf]
    %v140 = vld [vmem:[%s1 + $0xe8] sm:$0xf]
    %v141 = vld [vmem:[%s1 + $0xec] sm:$0xf]
    %v142 = vld [vmem:[%s1 + $0xf0] sm:$0xf]
    %v143 = vld [vmem:[%s1 + $0xf4] sm:$0xf]
    %v144 = vld [vmem:[%s1 + $0xf8] sm:$0xf]
    %v145 = vld [vmem:[%s1 + $0xfc] sm:$0xf]
    %v146 = vld [vmem:[%s1 + $0x100] sm:$0xf]
    %v147 = vld [vmem:[%s1 + $0x104] sm:$0xf]
    %v148 = vld [vmem:[%s1 + $0x108] sm:$0xf]
    %v149 = vld [vmem:[%s1 + $0x10c] sm:$0xf]
    %v150 = vld [vmem:[%s1 + $0x110] sm:$0xf]
    %v151 = vld [vmem:[%s1 + $0x114] sm:$0xf]
    %v152 = vld [vmem:[%s1 + $0x118] sm:$0xf]
    %v153 = vld [vmem:[%s1 + $0x11c] sm:$0xf]
    %v154 = vld [vmem:[%s1 + $0x120] sm:$0xf]
    %v155 = vld [vmem:[%s1 + $0x124] sm:$0xf]
    %v156 = vld [vmem:[%s1 + $0x128] sm:$0xf]
    %v157 = vld [vmem:[%s1 + $0x12c] sm:$0xf]
    %v158 = vld [vmem:[%s1 + $0x130] sm:$0xf]
    %v159 = vld [vmem:[%s1 + $0x134] sm:$0xf]
    %v160 = vld [vmem:[%s1 + $0x138] sm:$0xf]
    %v161 = vld [vmem:[%s1 + $0x13c] sm:$0xf]
    %v162 = vld [vmem:[%s1 + $0x140] sm:$0xf]
    %v163 = vld [vmem:[%s1 + $0x144] sm:$0xf]
    %v164 = vld [vmem:[%s1 + $0x148] sm:$0xf]
    %v165 = vld [vmem:[%s1 + $0x14c] sm:$0xf]
    %v166 = vld [vmem:[%s1 + $0x150] sm:$0xf]
    %v167 = vld [vmem:[%s1 + $0x154] sm:$0xf]
    %v168 = vld [vmem:[%s1 + $0x158] sm:$0xf]
    %v169 = vld [vmem:[%s1 + $0x15c] sm:$0xf]
    %v170 = vld [vmem:[%s1 + $0x160] sm:$0xf]
    %v171 = vld [vmem:[%s1 + $0x164] sm:$0xf]
    %v172 = vld [vmem:[%s1 + $0x168] sm:$0xf]
    %v173 = vld [vmem:[%s1 + $0x16c] sm:$0xf]
    %v174 = vld [vmem:[%s1 + $0x170] sm:$0xf]
    %v175 = vld [vmem:[%s1 + $0x174] sm:$0xf]
    %v176 = vld [vmem:[%s1 + $0x178] sm:$0xf]
    %v177 = vld [vmem:[%s1 + $0x17c] sm:$0xf]
    %v178 = vld [vmem:[%s1 + $0x180] sm:$0xf]
    %v179 = vld [vmem:[%s1 + $0x184] sm:$0xf]
    %v180 = vld [vmem:[%s1 + $0x188] sm:$0xf]
    %v181 = vld [vmem:[%s1 + $0x18c] sm:$0xf]
    %v182 = vld [vmem:[%s1 + $0x190] sm:$0xf]
    %v183 = vld [vmem:[%s1 + $0x194] sm:$0xf]
    %v184 = vld [vmem:[%s1 + $0x198] sm:$0xf]
    %v185 = vld [vmem:[%s1 + $0x19c] sm:$0xf]
    %v186 = vld [vmem:[%s1 + $0x1a0] sm:$0xf]
    %v187 = vld [vmem:[%s1 + $0x1a4] sm:$0xf]
    %v188 = vld [vmem:[%s1 + $0x1a8] sm:$0xf]
    %v189 = vld [vmem:[%s1 + $0x1ac] sm:$0xf]
    %v190 = vld [vmem:[%s1 + $0x1b0] sm:$0xf]
    %v191 = vld [vmem:[%s1 + $0x1b4] sm:$0xf]
    %v192 = vld [vmem:[%s1 + $0x1b8] sm:$0xf]
    %v193 = vld [vmem:[%s1 + $0x1bc] sm:$0xf]
    %v194 = vld [vmem:[%s1 + $0x1c0] sm:$0xf]
    %v195 = vld [vmem:[%s1 + $0x1c4] sm:$0xf]
    %v196 = vld [vmem:[%s1 + $0x1c8] sm:$0xf]
    %v197 = vld [vmem:[%s1 + $0x1cc] sm:$0xf]
    %v198 = vld [vmem:[%s1 + $0x1d0] sm:$0xf]
    %v199 = vld [vmem:[%s1 + $0x1d4] sm:$0xf]
    %v200 = vld [vmem:[%s1 + $0x1d8] sm:$0xf]
    %v201 = vld [vmem:[%s1 + $0x1dc] sm:$0xf]
    %v202 = vld [vmem:[%s1 + $0x1e0] sm:$0xf]
    %v203 = vld [vmem:[%s1 + $0x1e4] sm:$0xf]
    %v204 = vld [vmem:[%s1 + $0x1e8] sm:$0xf]
    %v205 = vld [vmem:[%s1 + $0x1ec] sm:$0xf]
    %v206 = vld [vmem:[%s1 + $0x1f0] sm:$0xf]
    %v207 = vld [vmem:[%s1 + $0x1f4] sm:$0xf]
    %v208 = vld [vmem:[%s1 + $0x1f8] sm:$0xf]
    %v209 = vld [vmem:[%s1 + $0x1fc] sm:$0xf]
    %v338 = vunpack.c.l.b16 %v82
    %v339 = vunpack.c.l.b16 %v83
    %v340 = vunpack.c.l.b16 %v84
    %v341 = vunpack.c.l.b16 %v85
    %v342 = vunpack.c.l.b16 %v86
    %v343 = vunpack.c.l.b16 %v87
    %v344 = vunpack.c.l.b16 %v88
    %v345 = vunpack.c.l.b16 %v89
    %v346 = vunpack.c.l.b16 %v90
    %v347 = vunpack.c.l.b16 %v91
    %v348 = vunpack.c.l.b16 %v92
    %v349 = vunpack.c.l.b16 %v93
    %v350 = vunpack.c.l.b16 %v94
    %v351 = vunpack.c.l.b16 %v95
    %v352 = vunpack.c.l.b16 %v96
    %v353 = vunpack.c.l.b16 %v97
    %v354 = vunpack.c.l.b16 %v98
    %v355 = vunpack.c.l.b16 %v99
    %v356 = vunpack.c.l.b16 %v100
    %v357 = vunpack.c.l.b16 %v101
    %v358 = vunpack.c.l.b16 %v102
    %v359 = vunpack.c.l.b16 %v103
    %v360 = vunpack.c.l.b16 %v104
    %v361 = vunpack.c.l.b16 %v105
    %v362 = vunpack.c.l.b16 %v106
    %v363 = vunpack.c.l.b16 %v107
    %v364 = vunpack.c.l.b16 %v108
    %v365 = vunpack.c.l.b16 %v109
    %v366 = vunpack.c.l.b16 %v110
    %v367 = vunpack.c.l.b16 %v111
    %v368 = vunpack.c.l.b16 %v112
    %v369 = vunpack.c.l.b16 %v113
    %v370 = vunpack.c.l.b16 %v114
    %v371 = vunpack.c.l.b16 %v115
    %v372 = vunpack.c.l.b16 %v116
    %v373 = vunpack.c.l.b16 %v117
    %v374 = vunpack.c.l.b16 %v118
    %v375 = vunpack.c.l.b16 %v119
    %v376 = vunpack.c.l.b16 %v120
    %v377 = vunpack.c.l.b16 %v121
    %v378 = vunpack.c.l.b16 %v122
    %v379 = vunpack.c.l.b16 %v123
    %v380 = vunpack.c.l.b16 %v124
    %v381 = vunpack.c.l.b16 %v125
    %v382 = vunpack.c.l.b16 %v126
    %v383 = vunpack.c.l.b16 %v127
    %v384 = vunpack.c.l.b16 %v128
    %v385 = vunpack.c.l.b16 %v129
    %v386 = vunpack.c.l.b16 %v130
    %v387 = vunpack.c.l.b16 %v131
    %v388 = vunpack.c.l.b16 %v132
    %v389 = vunpack.c.l.b16 %v133
    %v390 = vunpack.c.l.b16 %v134
    %v391 = vunpack.c.l.b16 %v135
    %v392 = vunpack.c.l.b16 %v136
    %v393 = vunpack.c.l.b16 %v137
    %v394 = vunpack.c.l.b16 %v138
    %v395 = vunpack.c.l.b16 %v139
    %v396 = vunpack.c.l.b16 %v140
    %v397 = vunpack.c.l.b16 %v141
    %v398 = vunpack.c.l.b16 %v142
    %v399 = vunpack.c.l.b16 %v143
    %v400 = vunpack.c.l.b16 %v144
    %v401 = vunpack.c.l.b16 %v145
    %v402 = vunpack.c.l.b16 %v146
    %v403 = vunpack.c.l.b16 %v147
    %v404 = vunpack.c.l.b16 %v148
    %v405 = vunpack.c.l.b16 %v149
    %v406 = vunpack.c.l.b16 %v150
    %v407 = vunpack.c.l.b16 %v151
    %v408 = vunpack.c.l.b16 %v152
    %v409 = vunpack.c.l.b16 %v153
    %v410 = vunpack.c.l.b16 %v154
    %v411 = vunpack.c.l.b16 %v155
    %v412 = vunpack.c.l.b16 %v156
    %v413 = vunpack.c.l.b16 %v157
    %v414 = vunpack.c.l.b16 %v158
    %v415 = vunpack.c.l.b16 %v159
    %v416 = vunpack.c.l.b16 %v160
    %v417 = vunpack.c.l.b16 %v161
    %v418 = vunpack.c.l.b16 %v162
    %v419 = vunpack.c.l.b16 %v163
    %v420 = vunpack.c.l.b16 %v164
    %v421 = vunpack.c.l.b16 %v165
    %v422 = vunpack.c.l.b16 %v166
    %v423 = vunpack.c.l.b16 %v167
    %v424 = vunpack.c.l.b16 %v168
    %v425 = vunpack.c.l.b16 %v169
    %v426 = vunpack.c.l.b16 %v170
    %v427 = vunpack.c.l.b16 %v171
    %v428 = vunpack.c.l.b16 %v172
    %v429 = vunpack.c.l.b16 %v173
    %v430 = vunpack.c.l.b16 %v174
    %v431 = vunpack.c.l.b16 %v175
    %v432 = vunpack.c.l.b16 %v176
    %v433 = vunpack.c.l.b16 %v177
    %v434 = vunpack.c.l.b16 %v178
    %v435 = vunpack.c.l.b16 %v179
    %v436 = vunpack.c.l.b16 %v180
    %v437 = vunpack.c.l.b16 %v181
    %v438 = vunpack.c.l.b16 %v182
    %v439 = vunpack.c.l.b16 %v183
    %v440 = vunpack.c.l.b16 %v184
    %v441 = vunpack.c.l.b16 %v185
    %v442 = vunpack.c.l.b16 %v186
    %v443 = vunpack.c.l.b16 %v187
    %v444 = vunpack.c.l.b16 %v188
    %v445 = vunpack.c.l.b16 %v189
    %v446 = vunpack.c.l.b16 %v190
    %v447 = vunpack.c.l.b16 %v191
    %v448 = vunpack.c.l.b16 %v192
    %v449 = vunpack.c.l.b16 %v193
    %v450 = vunpack.c.l.b16 %v194
    %v451 = vunpack.c.l.b16 %v195
    %v452 = vunpack.c.l.b16 %v196
    %v453 = vunpack.c.l.b16 %v197
    %v454 = vunpack.c.l.b16 %v198
    %v455 = vunpack.c.l.b16 %v199
    %v456 = vunpack.c.l.b16 %v200
    %v457 = vunpack.c.l.b16 %v201
    %v458 = vunpack.c.l.b16 %v202
    %v459 = vunpack.c.l.b16 %v203
    %v460 = vunpack.c.l.b16 %v204
    %v461 = vunpack.c.l.b16 %v205
    %v462 = vunpack.c.l.b16 %v206
    %v463 = vunpack.c.l.b16 %v207
    %v464 = vunpack.c.l.b16 %v208
    %v465 = vunpack.c.l.b16 %v209
    %v466 = vpack.c.b16 %v339, %v338
    %v467 = vpack.c.b16 %v341, %v340
    %v468 = vpack.c.b16 %v343, %v342
    %v469 = vpack.c.b16 %v345, %v344
    %v470 = vpack.c.b16 %v347, %v346
    %v471 = vpack.c.b16 %v349, %v348
    %v472 = vpack.c.b16 %v351, %v350
    %v473 = vpack.c.b16 %v353, %v352
    %v474 = vpack.c.b16 %v355, %v354
    %v475 = vpack.c.b16 %v357, %v356
    %v476 = vpack.c.b16 %v359, %v358
    %v477 = vpack.c.b16 %v361, %v360
    %v478 = vpack.c.b16 %v363, %v362
    %v479 = vpack.c.b16 %v365, %v364
    %v480 = vpack.c.b16 %v367, %v366
    %v481 = vpack.c.b16 %v369, %v368
    %v482 = vpack.c.b16 %v371, %v370
    %v483 = vpack.c.b16 %v373, %v372
    %v484 = vpack.c.b16 %v375, %v374
    %v485 = vpack.c.b16 %v377, %v376
    %v486 = vpack.c.b16 %v379, %v378
    %v487 = vpack.c.b16 %v381, %v380
    %v488 = vpack.c.b16 %v383, %v382
    %v489 = vpack.c.b16 %v385, %v384
    %v490 = vpack.c.b16 %v387, %v386
    %v491 = vpack.c.b16 %v389, %v388
    %v492 = vpack.c.b16 %v391, %v390
    %v493 = vpack.c.b16 %v393, %v392
    %v494 = vpack.c.b16 %v395, %v394
    %v495 = vpack.c.b16 %v397, %v396
    %v496 = vpack.c.b16 %v399, %v398
    %v497 = vpack.c.b16 %v401, %v400
    %v498 = vpack.c.b16 %v403, %v402
    %v499 = vpack.c.b16 %v405, %v404
    %v500 = vpack.c.b16 %v407, %v406
    %v501 = vpack.c.b16 %v409, %v408
    %v502 = vpack.c.b16 %v411, %v410
    %v503 = vpack.c.b16 %v413, %v412
    %v504 = vpack.c.b16 %v415, %v414
    %v505 = vpack.c.b16 %v417, %v416
    %v506 = vpack.c.b16 %v419, %v418
    %v507 = vpack.c.b16 %v421, %v420
    %v508 = vpack.c.b16 %v423, %v422
    %v509 = vpack.c.b16 %v425, %v424
    %v510 = vpack.c.b16 %v427, %v426
    %v511 = vpack.c.b16 %v429, %v428
    %v512 = vpack.c.b16 %v431, %v430
    %v513 = vpack.c.b16 %v433, %v432
    %v514 = vpack.c.b16 %v435, %v434
    %v515 = vpack.c.b16 %v437, %v436
    %v516 = vpack.c.b16 %v439, %v438
    %v517 = vpack.c.b16 %v441, %v440
    %v518 = vpack.c.b16 %v443, %v442
    %v519 = vpack.c.b16 %v445, %v444
    %v520 = vpack.c.b16 %v447, %v446
    %v521 = vpack.c.b16 %v449, %v448
    %v522 = vpack.c.b16 %v451, %v450
    %v523 = vpack.c.b16 %v453, %v452
    %v524 = vpack.c.b16 %v455, %v454
    %v525 = vpack.c.b16 %v457, %v456
    %v526 = vpack.c.b16 %v459, %v458
    %v527 = vpack.c.b16 %v461, %v460
    %v528 = vpack.c.b16 %v463, %v462
    %v529 = vpack.c.b16 %v465, %v464
    %594 = vmatprep.subr.bf16.mxu0 0
    %595 = vmatpush1.bf16.msra.mxu0 %v473
    %596 = vmatprep.subr.bf16.mxu0 0
    %597 = vmatpush1.bf16.msra.mxu0 %v472
    %598 = vmatprep.subr.bf16.mxu0 0
    %599 = vmatpush1.bf16.msra.mxu0 %v471
    %600 = vmatprep.subr.bf16.mxu0 0
    %601 = vmatpush1.bf16.msra.mxu0 %v470
    %602 = vmatprep.subr.bf16.mxu0 0
    %603 = vmatpush1.bf16.msra.mxu0 %v469
    %604 = vmatprep.subr.bf16.mxu0 0
    %605 = vmatpush1.bf16.msra.mxu0 %v468
    %606 = vmatprep.subr.bf16.mxu0 0
    %607 = vmatpush1.bf16.msra.mxu0 %v467
    %608 = vmatprep.subr.bf16.mxu0 0
    %609 = vmatpush1.bf16.msra.mxu0 %v466
    %610 = vmatprep.subr.bf16.mxu0 0
    %611 = vmatpush2.bf16.msra.mxu0 %v481
    %612 = vmatprep.subr.bf16.mxu0 0
    %613 = vmatpush2.bf16.msra.mxu0 %v480
    %614 = vmatprep.subr.bf16.mxu0 0
    %615 = vmatpush2.bf16.msra.mxu0 %v479
    %616 = vmatprep.subr.bf16.mxu0 0
    %617 = vmatpush2.bf16.msra.mxu0 %v478
    %618 = vmatprep.subr.bf16.mxu0 0
    %619 = vmatpush2.bf16.msra.mxu0 %v477
    %620 = vmatprep.subr.bf16.mxu0 0
    %621 = vmatpush2.bf16.msra.mxu0 %v476
    %622 = vmatprep.subr.bf16.mxu0 0
    %623 = vmatpush2.bf16.msra.mxu0 %v475
    %624 = vmatprep.subr.bf16.mxu0 0
    %625 = vmatpush2.bf16.msra.mxu0 %v474
    %626 = vmatprep.mubr.bf16.mxu0 %v74
    %627 = vmatmul.mubr.bf16.gmra.mxu0 %v73
    %v628 = vpop.f32.mrf.mxu0
    %v629 = vadd.f32 0.0, %v628
    %v630 = vpop.f32.mrf.mxu0
    %v631 = vpop.f32.mrf.mxu0
    %v632 = vpop.f32.mrf.mxu0
    %633 = vdwg.mxu0
    %634 = vmatprep.subr.bf16.mxu0 0
    %635 = vmatpush1.bf16.msra.mxu0 %v489
    %636 = vmatprep.subr.bf16.mxu0 0
    %637 = vmatpush1.bf16.msra.mxu0 %v488
    %638 = vmatprep.subr.bf16.mxu0 0
    %639 = vmatpush1.bf16.msra.mxu0 %v487
    %640 = vmatprep.subr.bf16.mxu0 0
    %641 = vmatpush1.bf16.msra.mxu0 %v486
    %642 = vmatprep.subr.bf16.mxu0 0
    %643 = vmatpush1.bf16.msra.mxu0 %v485
    %644 = vmatprep.subr.bf16.mxu0 0
    %645 = vmatpush1.bf16.msra.mxu0 %v484
    %646 = vmatprep.subr.bf16.mxu0 0
    %647 = vmatpush1.bf16.msra.mxu0 %v483
    %648 = vmatprep.subr.bf16.mxu0 0
    %649 = vmatpush1.bf16.msra.mxu0 %v482
    %650 = vmatprep.subr.bf16.mxu0 0
    %651 = vmatpush2.bf16.msra.mxu0 %v497
    %652 = vmatprep.subr.bf16.mxu0 0
    %653 = vmatpush2.bf16.msra.mxu0 %v496
    %654 = vmatprep.subr.bf16.mxu0 0
    %655 = vmatpush2.bf16.msra.mxu0 %v495
    %656 = vmatprep.subr.bf16.mxu0 0
    %657 = vmatpush2.bf16.msra.mxu0 %v494
    %658 = vmatprep.subr.bf16.mxu0 0
    %659 = vmatpush2.bf16.msra.mxu0 %v493
    %660 = vmatprep.subr.bf16.mxu0 0
    %661 = vmatpush2.bf16.msra.mxu0 %v492
    %662 = vmatprep.subr.bf16.mxu0 0
    %663 = vmatpush2.bf16.msra.mxu0 %v491
    %664 = vmatprep.subr.bf16.mxu0 0
    %665 = vmatpush2.bf16.msra.mxu0 %v490
    %666 = vmatprep.mubr.bf16.mxu0 %v76
    %667 = vmatmul.mubr.bf16.gmra.mxu0 %v75
    %v668 = vpop.f32.mrf.mxu0
    %v669 = vadd.f32 %v629, %v668
    %v670 = vpop.f32.mrf.mxu0
    %v671 = vpop.f32.mrf.mxu0
    %v672 = vpop.f32.mrf.mxu0
    %673 = vdwg.mxu0
    %674 = vmatprep.subr.bf16.mxu0 0
    %675 = vmatpush1.bf16.msra.mxu0 %v505
    %676 = vmatprep.subr.bf16.mxu0 0
    %677 = vmatpush1.bf16.msra.mxu0 %v504
    %678 = vmatprep.subr.bf16.mxu0 0
    %679 = vmatpush1.bf16.msra.mxu0 %v503
    %680 = vmatprep.subr.bf16.mxu0 0
    %681 = vmatpush1.bf16.msra.mxu0 %v502
    %682 = vmatprep.subr.bf16.mxu0 0
    %683 = vmatpush1.bf16.msra.mxu0 %v501
    %684 = vmatprep.subr.bf16.mxu0 0
    %685 = vmatpush1.bf16.msra.mxu0 %v500
    %686 = vmatprep.subr.bf16.mxu0 0
    %687 = vmatpush1.bf16.msra.mxu0 %v499
    %688 = vmatprep.subr.bf16.mxu0 0
    %689 = vmatpush1.bf16.msra.mxu0 %v498
    %690 = vmatprep.subr.bf16.mxu0 0
    %691 = vmatpush2.bf16.msra.mxu0 %v513
    %692 = vmatprep.subr.bf16.mxu0 0
    %693 = vmatpush2.bf16.msra.mxu0 %v512
    %694 = vmatprep.subr.bf16.mxu0 0
    %695 = vmatpush2.bf16.msra.mxu0 %v511
    %696 = vmatprep.subr.bf16.mxu0 0
    %697 = vmatpush2.bf16.msra.mxu0 %v510
    %698 = vmatprep.subr.bf16.mxu0 0
    %699 = vmatpush2.bf16.msra.mxu0 %v509
    %700 = vmatprep.subr.bf16.mxu0 0
    %701 = vmatpush2.bf16.msra.mxu0 %v508
    %702 = vmatprep.subr.bf16.mxu0 0
    %703 = vmatpush2.bf16.msra.mxu0 %v507
    %704 = vmatprep.subr.bf16.mxu0 0
    %705 = vmatpush2.bf16.msra.mxu0 %v506
    %706 = vmatprep.mubr.bf16.mxu0 %v78
    %707 = vmatmul.mubr.bf16.gmra.mxu0 %v77
    %v708 = vpop.f32.mrf.mxu0
    %v709 = vadd.f32 %v669, %v708
    %v710 = vpop.f32.mrf.mxu0
    %v711 = vpop.f32.mrf.mxu0
    %v712 = vpop.f32.mrf.mxu0
    %713 = vdwg.mxu0
    %714 = vmatprep.subr.bf16.mxu0 0
    %715 = vmatpush1.bf16.msra.mxu0 %v521
    %716 = vmatprep.subr.bf16.mxu0 0
    %717 = vmatpush1.bf16.msra.mxu0 %v520
    %718 = vmatprep.subr.bf16.mxu0 0
    %719 = vmatpush1.bf16.msra.mxu0 %v519
    %720 = vmatprep.subr.bf16.mxu0 0
    %721 = vmatpush1.bf16.msra.mxu0 %v518
    %722 = vmatprep.subr.bf16.mxu0 0
    %723 = vmatpush1.bf16.msra.mxu0 %v517
    %724 = vmatprep.subr.bf16.mxu0 0
    %725 = vmatpush1.bf16.msra.mxu0 %v516
    %726 = vmatprep.subr.bf16.mxu0 0
    %727 = vmatpush1.bf16.msra.mxu0 %v515
    %728 = vmatprep.subr.bf16.mxu0 0
    %729 = vmatpush1.bf16.msra.mxu0 %v514
    %730 = vmatprep.subr.bf16.mxu0 0
    %731 = vmatpush2.bf16.msra.mxu0 %v529
    %732 = vmatprep.subr.bf16.mxu0 0
    %733 = vmatpush2.bf16.msra.mxu0 %v528
    %734 = vmatprep.subr.bf16.mxu0 0
    %735 = vmatpush2.bf16.msra.mxu0 %v527
    %736 = vmatprep.subr.bf16.mxu0 0
    %737 = vmatpush2.bf16.msra.mxu0 %v526
    %738 = vmatprep.subr.bf16.mxu0 0
    %739 = vmatpush2.bf16.msra.mxu0 %v525
    %740 = vmatprep.subr.bf16.mxu0 0
    %741 = vmatpush2.bf16.msra.mxu0 %v524
    %742 = vmatprep.subr.bf16.mxu0 0
    %743 = vmatpush2.bf16.msra.mxu0 %v523
    %744 = vmatprep.subr.bf16.mxu0 0
    %745 = vmatpush2.bf16.msra.mxu0 %v522
    %746 = vmatprep.mubr.bf16.mxu0 %v80
    %747 = vmatmul.mubr.bf16.gmra.mxu0 %v79
    %v748 = vpop.f32.mrf.mxu0
    %v749 = vadd.f32 %v709, %v748
    %v750 = vpop.f32.mrf.mxu0
    %v751 = vpop.f32.mrf.mxu0
    %v752 = vpop.f32.mrf.mxu0
    %753 = vdwg.mxu0
    %v754 = vadd.f32 %v81, %v749
    %vm755 = vcmask 254976
    %756 = vst.msk [vmem:[#allocation2] sm:$0x3] %vm755, %v754
    // Predicated region
    $region18: #{tpu_custom_call.1} parent=1 // pred_check
      %p757 = pneg %p16
    $region19: #{tpu_custom_call.1} parent=1 // pred_check_branch
      %759 = sbr.rel (%p757) target = $region21
    $region20: #{tpu_custom_call.1} parent=1 // pred_region
      %v760 = vld [vmem:[#allocation2] sm:$0x3]
      %v761 = vmul.f32 %v760, %v760
      %v762 = vsel %vm755, %v761, 0.0
      %763 = vadd.xlane.f32.xlu0 %v762
      %v764 = vpop.xlane.xlu0 %763
      %v765 = vadd.f32 %v764, 1e-12
      %v766 = vrsqrt.pop %v765
      %v767 = vmul.f32 %v760, %v766
      %v768 = vpack.c.bf16 %v767, %v767
      %v769 = vld [vmem:[%s2] sm:$0xf]
      %v770 = vld [vmem:[%s2 + $0x4] sm:$0xf]
      %v771 = vld [vmem:[%s2 + $0x8] sm:$0xf]
      %v772 = vld [vmem:[%s2 + $0xc] sm:$0xf]
      %v777 = vunpack.c.l.b16 %v769
      %v778 = vunpack.c.l.b16 %v770
      %v779 = vunpack.c.l.b16 %v771
      %v780 = vunpack.c.l.b16 %v772
      %v781 = vpack.c.b16 %v778, %v777
      %v782 = vpack.c.b16 %v780, %v779
      %vm785 = vcmask 261120
      %v787 = vsel %vm785, %v768, 0
      %789 = vmatprep.subr.bf16.mxu0 0
      %790 = vmatpush1.bf16.msra.mxu0 0
      %791 = vmatprep.subr.bf16.mxu0 0
      %792 = vmatpush1.bf16.msra.mxu0 0
      %793 = vmatprep.subr.bf16.mxu0 0
      %794 = vmatpush1.bf16.msra.mxu0 0
      %795 = vmatprep.subr.bf16.mxu0 0
      %796 = vmatpush1.bf16.msra.mxu0 0
      %797 = vmatprep.subr.bf16.mxu0 0
      %798 = vmatpush1.bf16.msra.mxu0 0
      %799 = vmatprep.subr.bf16.mxu0 0
      %800 = vmatpush1.bf16.msra.mxu0 0
      %801 = vmatprep.subr.bf16.mxu0 0
      %802 = vmatpush1.bf16.msra.mxu0 %v782
      %803 = vmatprep.subr.bf16.mxu0 0
      %804 = vmatpush1.bf16.msra.mxu0 %v781
      %805 = vmatprep.subr.bf16.mxu0 0
      %806 = vmatpush2.bf16.msra.mxu0 0
      %807 = vmatprep.subr.bf16.mxu0 0
      %808 = vmatpush2.bf16.msra.mxu0 0
      %809 = vmatprep.subr.bf16.mxu0 0
      %810 = vmatpush2.bf16.msra.mxu0 0
      %811 = vmatprep.subr.bf16.mxu0 0
      %812 = vmatpush2.bf16.msra.mxu0 0
      %813 = vmatprep.subr.bf16.mxu0 0
      %814 = vmatpush2.bf16.msra.mxu0 0
      %815 = vmatprep.subr.bf16.mxu0 0
      %816 = vmatpush2.bf16.msra.mxu0 0
      %817 = vmatprep.subr.bf16.mxu0 0
      %818 = vmatpush2.bf16.msra.mxu0 0
      %819 = vmatprep.subr.bf16.mxu0 0
      %820 = vmatpush2.bf16.msra.mxu0 0
      %821 = vmatprep.mubr.bf16.mxu0 0
      %822 = vmatmul.mubr.bf16.gmra.mxu0 %v787
      %v823 = vpop.f32.mrf.mxu0
      %v824 = vadd.f32 0.0, %v823
      %v825 = vpop.f32.mrf.mxu0
      %v826 = vpop.f32.mrf.mxu0
      %v827 = vpop.f32.mrf.mxu0
      %828 = vdwg.mxu0
      %829 = vst [vmem:[#allocation3] sm:$0x3] %v824
    $region21: #{tpu_custom_call.1} parent=1 // pred_fallthru
      _
    // Predicated region
    $region22: #{tpu_custom_call.1} parent=1 // pred_check
      _
    $region23: #{tpu_custom_call.1} parent=1 // pred_check_branch
      %831 = sbr.rel (0) target = $region25
    $region24: #{tpu_custom_call.1} parent=1 // pred_region
      %s833 = ssub.s32 32, 32
      %834 = vsyncadd [#allocation4], %s833
      %s836 = sshll.u32 [#allocation3], 4
      %s837 = int_to_ptr.vmem [resolvable:$true] %s836
      %839 = dma.vmem_to_hbm [thread:$0]  %s837, 32, %s3, [#allocation4]
    $region25: #{tpu_custom_call.1} parent=1 // pred_fallthru
      _
    // Predicated region
    $region26: #{tpu_custom_call.1} parent=1 // pred_check
      _
    $region27: #{tpu_custom_call.1} parent=1 // pred_check_branch
      %841 = sbr.rel (0) target = $region29
    $region28: #{tpu_custom_call.1} parent=1 // pred_region
      %842 = dma.done [#allocation4], 32
    $region29: #{tpu_custom_call.1} parent=1 // pred_fallthru
      _
    %843 = vsyncpa [#allocation4], 1

</llo_original>
